<compile_context>
chip_gen: v7x
topology: tpu7x:2x2x1
jax: 0.10.0
libtpu: 0.0.40
codegen_flags: <defaults>
</compile_context>

<pallas_src>
import jax
import jax.numpy as jnp
from jax.experimental import pallas as pl
from jax.experimental.pallas import tpu as pltpu

# synthetic engine "binding" configuration
N, C_IN, H, W = 2, 4, 16, 16
C_OUT, KH, KW = 8, 3, 3
PAD = 1


def _engine_conv_kernel(cols_ref, w_ref, b_ref, o_ref):
    """Fused 3x3 conv + bias + ReLU for the whole batch, one matmul.

    cols_ref: (Kp, N*HW)    im2col patches, Kp = Cin*KH*KW padded to mult of 8
    w_ref:    (Cout, Kp)    packed conv weight (zero-padded K columns)
    b_ref:    (Cout, 1)     bias column
    o_ref:    (Cout, N*HW)  output; lane axis N*HW = 512 (multiple of 128)
    """
    acc = jnp.dot(w_ref[...], cols_ref[...],
                  preferred_element_type=jnp.float32)   # single MXU matmul
    # f32 epilogue (keeps the fast path on v5e even if operands go bf16 later)
    o_ref[...] = jnp.maximum(acc + b_ref[...], 0.0)


@jax.jit
def trt_module_forward(x_nchw, weight, bias):
    """Mimics TRTModule.forward for a single-input / single-output engine.

    x_nchw : (N, Cin, H, W)      float32 (PyTorch NCHW)
    weight : (Cout, Cin, KH, KW) float32 (PyTorch OIHW conv weight)
    bias   : (Cout,)
    returns: (N, Cout, H, W)     float32 (single output -> returned directly,
                                          like `outputs[0]` in TRTModule)
    """
    n, cin, h, w = x_nchw.shape
    cout = weight.shape[0]
    hw = h * w
    cols_width = n * hw                       # 512 lanes -> unmasked stores
    k_raw = cin * KH * KW                     # 36
    k_pad = ((k_raw + 7) // 8) * 8            # 40, aligned sublane count

    # im2col (single fused XLA producer under jit): 9 static slices of the
    # padded NCHW input, ordered channel-major / tap-minor so the packed
    # weight is a plain reshape of the OIHW layout.
    x_pad = jnp.pad(x_nchw, ((0, 0), (0, 0), (PAD, PAD), (PAD, PAD)))
    patches = jnp.stack(
        [x_pad[:, :, kh:kh + h, kw:kw + w]
         for kh in range(KH) for kw in range(KW)],
        axis=2)                                          # (N, Cin, 9, H, W)
    cols = patches.transpose(1, 2, 0, 3, 4).reshape(k_raw, cols_width)
    cols = jnp.pad(cols, ((0, k_pad - k_raw), (0, 0)))   # (40, 512)

    w_mat = jnp.pad(weight.reshape(cout, k_raw),
                    ((0, 0), (0, k_pad - k_raw)))        # (Cout, 40)
    b_col = bias.reshape(cout, 1)                        # (Cout, 1)

    # Grid-less pallas_call: one launch, whole working set resident in VMEM.
    out = pl.pallas_call(
        _engine_conv_kernel,
        out_shape=jax.ShapeDtypeStruct((cout, cols_width), jnp.float32),
        in_specs=[pl.BlockSpec(memory_space=pltpu.MemorySpace.VMEM)] * 3,
        out_specs=pl.BlockSpec(memory_space=pltpu.MemorySpace.VMEM),
    )(cols, w_mat, b_col)

    # (Cout, N*HW) -> (N, Cout, H, W): wrapper-side layout plumbing only.
    return out.reshape(cout, n, h, w).transpose(1, 0, 2, 3)


def _reference(x_nchw, weight, bias):
    """Pure-JAX reference (lax conv, default precision) for a sanity check."""
    y = jax.lax.conv_general_dilated(
        x_nchw, weight,
        window_strides=(1, 1), padding=((PAD, PAD), (PAD, PAD)),
        dimension_numbers=("NCHW", "OIHW", "NCHW"))
    y = y + bias[None, :, None, None]
    return jnp.maximum(y, 0.0)


if __name__ == "__main__":
    key = jax.random.PRNGKey(0)
    kx, kw, kb = jax.random.split(key, 3)

    # deterministic synthetic "engine" parameters
    x = jax.random.normal(kx, (N, C_IN, H, W), dtype=jnp.float32)
    weight = 0.1 * jax.random.normal(kw, (C_OUT, C_IN, KH, KW), dtype=jnp.float32)
    bias = 0.05 * jax.random.normal(kb, (C_OUT,), dtype=jnp.float32)

    out = jax.block_until_ready(trt_module_forward(x, weight, bias))
    ref = jax.block_until_ready(_reference(x, weight, bias))

    assert out.shape == (N, C_OUT, H, W)
    # Default-precision (bf16-pass) MXU matmul vs. XLA conv: ~1e-2-level error.
    assert jnp.allclose(out, ref, atol=5e-2, rtol=5e-2)

    print("KERNEL_OK")
</pallas_src>

<mosaic_0001>
module attributes {stable_mosaic.version = 11 : i64} {
  func.func @_engine_conv_kernel(%arg0: memref<40x512xf32, #tpu.memory_space<vmem>>, %arg1: memref<8x40xf32, #tpu.memory_space<vmem>>, %arg2: memref<8x1xf32, #tpu.memory_space<vmem>>, %arg3: memref<8x512xf32, #tpu.memory_space<vmem>>) attributes {dimension_semantics = [], scalar_prefetch = 0 : i64, scratch_operands = 0 : i64, tpu.core_type = #tpu.core_type<tc>} {
    %c0 = arith.constant 0 : index
    %c0_0 = arith.constant 0 : index
    %0 = vector.load %arg1[%c0, %c0_0] : memref<8x40xf32, #tpu.memory_space<vmem>>, vector<8x40xf32>
    %c0_1 = arith.constant 0 : index
    %c0_2 = arith.constant 0 : index
    %1 = vector.load %arg0[%c0_1, %c0_2] : memref<40x512xf32, #tpu.memory_space<vmem>>, vector<40x512xf32>
    %cst = arith.constant dense<0.000000e+00> : vector<8x512xf32>
    %2 = tpu.matmul %0, %1, %cst {dimension_numbers = #tpu.dot_dimension_numbers<[1], [0], [0], [1], [0, 0, 1, 1], [], []>} : vector<8x40xf32>, vector<40x512xf32>, vector<8x512xf32> -> vector<8x512xf32>
    %c0_3 = arith.constant 0 : index
    %c0_4 = arith.constant 0 : index
    %3 = vector.load %arg2[%c0_3, %c0_4] : memref<8x1xf32, #tpu.memory_space<vmem>>, vector<8x1xf32>
    %4 = vector.broadcast %3 : vector<8x1xf32> to vector<8x512xf32>
    %5 = arith.addf %2, %4 : vector<8x512xf32>
    %cst_5 = arith.constant 0.000000e+00 : f32
    %6 = vector.broadcast %cst_5 : f32 to vector<8x512xf32>
    %7 = arith.maximumf %5, %6 : vector<8x512xf32>
    %c0_6 = arith.constant 0 : index
    %c0_7 = arith.constant 0 : index
    %8 = vector.load %arg3[%c0_6, %c0_7] : memref<8x512xf32, #tpu.memory_space<vmem>>, vector<8x512xf32>
    tpu.vector_store %arg3[%c0_6, %c0_7], %7 {strides = array<i32>} : memref<8x512xf32, #tpu.memory_space<vmem>>, vector<8x512xf32>,
    return
  }
}

</mosaic_0001>

<llo_original>
// kernel: trt_module_forward.1
$region0: #{trt_module_forward.1}
  #allocation0 [shape = 'u32[]', space=smem, size = 0x4, offset = 0x4, fixed_abs, tag = 'smem constant byte address 0x4 - core index']
  #allocation1 [shape = 'u32[144,128]{1,0:T(1,128)}', space=vmem, size = 0x12000, scoped, tag = 'internal scratch']
  %s0 = inlined_call_operand.vmem [shape: f32[40,512], index: 0, kind: input, shape index: {}]
  %s1 = inlined_call_operand.vmem [shape: f32[8,40], index: 1, kind: input, shape index: {}]
  %s2 = inlined_call_operand.vmem [shape: f32[8,1], index: 2, kind: input, shape index: {}]
  %s3 = inlined_call_operand.vmem [shape: f32[8,512], index: 3, kind: output, shape index: {}]
  %s4 = sld [smem:[#allocation0]]
  $region22: #{trt_module_forward.1} parent=0
    _
  %s6 = ssub.s32 1, %s4
  %s7 = scalar_select 0, %s6, %s4
  // Predicated region
  $region2: #{trt_module_forward.1} parent=0 // pred_check
    _
  $region3: #{trt_module_forward.1} parent=0 // pred_check_branch
    %9 = sbr.rel (0) target = $region5
  $region4: #{trt_module_forward.1} parent=0 // pred_region
    _
  $region5: #{trt_module_forward.1} parent=0 // pred_fallthru
    _
  // Predicated region
  $region6: #{trt_module_forward.1} parent=0 // pred_check
    _
  $region7: #{trt_module_forward.1} parent=0 // pred_check_branch
    %11 = sbr.rel (0) target = $region9
  $region8: #{trt_module_forward.1} parent=0 // pred_region
    _
  $region9: #{trt_module_forward.1} parent=0 // pred_fallthru
    _
  // Predicated region
  $region10: #{trt_module_forward.1} parent=0 // pred_check
    _
  $region11: #{trt_module_forward.1} parent=0 // pred_check_branch
    %13 = sbr.rel (0) target = $region13
  $region12: #{trt_module_forward.1} parent=0 // pred_region
    _
  $region13: #{trt_module_forward.1} parent=0 // pred_fallthru
    _
  %v14 = vld [vmem:[%s1] sm:$0xff]
  %v15 = vld [vmem:[%s0] sm:$0xff]
  %v16 = vld [vmem:[%s0 + $0x8] sm:$0xff]
  %v17 = vld [vmem:[%s0 + $0x10] sm:$0xff]
  %v18 = vld [vmem:[%s0 + $0x18] sm:$0xff]
  %v19 = vld [vmem:[%s0 + $0x20] sm:$0xff]
  %v20 = vld [vmem:[%s0 + $0x28] sm:$0xff]
  %v21 = vld [vmem:[%s0 + $0x30] sm:$0xff]
  %v22 = vld [vmem:[%s0 + $0x38] sm:$0xff]
  %v23 = vld [vmem:[%s0 + $0x40] sm:$0xff]
  %v24 = vld [vmem:[%s0 + $0x48] sm:$0xff]
  %v25 = vld [vmem:[%s0 + $0x50] sm:$0xff]
  %v26 = vld [vmem:[%s0 + $0x58] sm:$0xff]
  %v27 = vld [vmem:[%s0 + $0x60] sm:$0xff]
  %v28 = vld [vmem:[%s0 + $0x68] sm:$0xff]
  %v29 = vld [vmem:[%s0 + $0x70] sm:$0xff]
  %v30 = vld [vmem:[%s0 + $0x78] sm:$0xff]
  %v31 = vld [vmem:[%s0 + $0x80] sm:$0xff]
  %v32 = vld [vmem:[%s0 + $0x88] sm:$0xff]
  %v33 = vld [vmem:[%s0 + $0x90] sm:$0xff]
  %v34 = vld [vmem:[%s0 + $0x98] sm:$0xff]
  %v35 = vld [vmem:[%s2] sm:$0xff]
  %37 = vset.pattern.permute.xlu0 0
  %38 = vperm.xlu0 %37, %v35
  %v39 = vpop.permute.xlu0 %38
  %vm41 = vcmask 326656
  %v43 = vsel %vm41, %v14, 0
  %45 = vmatprep.subr.mxu0 %v16
  %46 = vmatpush1.msra.mxu0 %v15
  %47 = vmatprep.subr.mxu0 %v20
  %48 = vmatpush1.msra.mxu0 %v19
  %49 = vmatprep.subr.mxu0 %v24
  %50 = vmatpush1.msra.mxu0 %v23
  %51 = vmatprep.subr.mxu0 %v28
  %52 = vmatpush1.msra.mxu0 %v27
  %53 = vmatprep.subr.mxu0 %v32
  %54 = vmatpush1.msra.mxu0 %v31
  %55 = vmatprep.subr.mxu0 0.0
  %56 = vmatpush1.msra.mxu0 0.0
  %57 = vmatprep.subr.mxu0 0.0
  %58 = vmatpush1.msra.mxu0 0.0
  %59 = vmatprep.subr.mxu0 0.0
  %60 = vmatpush1.msra.mxu0 0.0
  %61 = vmatprep.subr.mxu0 0.0
  %62 = vmatpush1.msra.mxu0 0.0
  %63 = vmatprep.subr.mxu0 0.0
  %64 = vmatpush1.msra.mxu0 0.0
  %65 = vmatprep.subr.mxu0 0.0
  %66 = vmatpush1.msra.mxu0 0.0
  %67 = vmatprep.subr.mxu0 0.0
  %68 = vmatpush1.msra.mxu0 0.0
  %69 = vmatprep.subr.mxu0 0.0
  %70 = vmatpush1.msra.mxu0 0.0
  %71 = vmatprep.subr.mxu0 0.0
  %72 = vmatpush1.msra.mxu0 0.0
  %73 = vmatprep.subr.mxu0 0.0
  %74 = vmatpush1.msra.mxu0 0.0
  %75 = vmatprep.subr.mxu0 0.0
  %76 = vmatpush1.msra.mxu0 0.0
  %77 = vmatprep.subr.mxu0 0.0
  %78 = vmatpush1.msra.mxu0 0.0
  %79 = vmatprep.subr.mxu0 0.0
  %80 = vmatpush1.msra.mxu0 0.0
  %81 = vmatprep.subr.mxu0 0.0
  %82 = vmatpush1.msra.mxu0 0.0
  %83 = vmatprep.subr.mxu0 0.0
  %84 = vmatpush1.msra.mxu0 0.0
  %85 = vmatprep.subr.mxu0 0.0
  %86 = vmatpush1.msra.mxu0 0.0
  %87 = vmatprep.subr.mxu0 0.0
  %88 = vmatpush1.msra.mxu0 0.0
  %89 = vmatprep.subr.mxu0 0.0
  %90 = vmatpush1.msra.mxu0 0.0
  %91 = vmatprep.subr.mxu0 0.0
  %92 = vmatpush1.msra.mxu0 0.0
  %93 = vmatprep.subr.mxu0 0.0
  %94 = vmatpush1.msra.mxu0 0.0
  %95 = vmatprep.subr.mxu0 0.0
  %96 = vmatpush1.msra.mxu0 0.0
  %97 = vmatprep.subr.mxu0 0.0
  %98 = vmatpush1.msra.mxu0 0.0
  %99 = vmatprep.subr.mxu0 0.0
  %100 = vmatpush1.msra.mxu0 0.0
  %101 = vmatprep.subr.mxu0 0.0
  %102 = vmatpush1.msra.mxu0 0.0
  %103 = vmatprep.subr.mxu0 0.0
  %104 = vmatpush1.msra.mxu0 0.0
  %105 = vmatprep.subr.mxu0 0.0
  %106 = vmatpush1.msra.mxu0 0.0
  %107 = vmatprep.subr.mxu0 0.0
  %108 = vmatpush1.msra.mxu0 0.0
  %109 = vmatprep.mubr.f32.mxu0 0.0
  %110 = vmatmul.mubr.f32.gmra.mrb[0].mxu0 %v43
  %v111 = vpop.f32.mrb[0].mxu0
  %v112 = vadd.f32 %v39, %v111
  %v113 = vpop.f32.mrb[0].mxu0
  %v114 = vadd.f32 %v39, %v113
  %115 = vdwg.mxu0
  %116 = vmatprep.subr.mxu0 %v18
  %117 = vmatpush1.msra.mxu0 %v17
  %118 = vmatprep.subr.mxu0 %v22
  %119 = vmatpush1.msra.mxu0 %v21
  %120 = vmatprep.subr.mxu0 %v26
  %121 = vmatpush1.msra.mxu0 %v25
  %122 = vmatprep.subr.mxu0 %v30
  %123 = vmatpush1.msra.mxu0 %v29
  %124 = vmatprep.subr.mxu0 %v34
  %125 = vmatpush1.msra.mxu0 %v33
  %126 = vmatprep.subr.mxu0 0.0
  %127 = vmatpush1.msra.mxu0 0.0
  %128 = vmatprep.subr.mxu0 0.0
  %129 = vmatpush1.msra.mxu0 0.0
  %130 = vmatprep.subr.mxu0 0.0
  %131 = vmatpush1.msra.mxu0 0.0
  %132 = vmatprep.subr.mxu0 0.0
  %133 = vmatpush1.msra.mxu0 0.0
  %134 = vmatprep.subr.mxu0 0.0
  %135 = vmatpush1.msra.mxu0 0.0
  %136 = vmatprep.subr.mxu0 0.0
  %137 = vmatpush1.msra.mxu0 0.0
  %138 = vmatprep.subr.mxu0 0.0
  %139 = vmatpush1.msra.mxu0 0.0
  %140 = vmatprep.subr.mxu0 0.0
  %141 = vmatpush1.msra.mxu0 0.0
  %142 = vmatprep.subr.mxu0 0.0
  %143 = vmatpush1.msra.mxu0 0.0
  %144 = vmatprep.subr.mxu0 0.0
  %145 = vmatpush1.msra.mxu0 0.0
  %146 = vmatprep.subr.mxu0 0.0
  %147 = vmatpush1.msra.mxu0 0.0
  %148 = vmatprep.subr.mxu0 0.0
  %149 = vmatpush1.msra.mxu0 0.0
  %150 = vmatprep.subr.mxu0 0.0
  %151 = vmatpush1.msra.mxu0 0.0
  %152 = vmatprep.subr.mxu0 0.0
  %153 = vmatpush1.msra.mxu0 0.0
  %154 = vmatprep.subr.mxu0 0.0
  %155 = vmatpush1.msra.mxu0 0.0
  %156 = vmatprep.subr.mxu0 0.0
  %157 = vmatpush1.msra.mxu0 0.0
  %158 = vmatprep.subr.mxu0 0.0
  %159 = vmatpush1.msra.mxu0 0.0
  %160 = vmatprep.subr.mxu0 0.0
  %161 = vmatpush1.msra.mxu0 0.0
  %162 = vmatprep.subr.mxu0 0.0
  %163 = vmatpush1.msra.mxu0 0.0
  %164 = vmatprep.subr.mxu0 0.0
  %165 = vmatpush1.msra.mxu0 0.0
  %166 = vmatprep.subr.mxu0 0.0
  %167 = vmatpush1.msra.mxu0 0.0
  %168 = vmatprep.subr.mxu0 0.0
  %169 = vmatpush1.msra.mxu0 0.0
  %170 = vmatprep.subr.mxu0 0.0
  %171 = vmatpush1.msra.mxu0 0.0
  %172 = vmatprep.subr.mxu0 0.0
  %173 = vmatpush1.msra.mxu0 0.0
  %174 = vmatprep.subr.mxu0 0.0
  %175 = vmatpush1.msra.mxu0 0.0
  %176 = vmatprep.subr.mxu0 0.0
  %177 = vmatpush1.msra.mxu0 0.0
  %178 = vmatprep.subr.mxu0 0.0
  %179 = vmatpush1.msra.mxu0 0.0
  %180 = vmatprep.mubr.f32.mxu0 0.0
  %181 = vmatmul.mubr.f32.gmra.mrb[0].mxu0 %v43
  %v182 = vpop.f32.mrb[0].mxu0
  %v183 = vadd.f32 %v39, %v182
  %v184 = vpop.f32.mrb[0].mxu0
  %v185 = vadd.f32 %v39, %v184
  %186 = vdwg.mxu0
  %v187 = vmax.f32 %v112, 0.0
  %v188 = vmax.f32 %v114, 0.0
  %v189 = vmax.f32 %v183, 0.0
  %v190 = vmax.f32 %v185, 0.0
  %191 = vst [vmem:[%s3] sm:$0xff] %v187
  %192 = vst [vmem:[%s3 + $0x8] sm:$0xff] %v188
  %193 = vst [vmem:[%s3 + $0x10] sm:$0xff] %v189
  %194 = vst [vmem:[%s3 + $0x18] sm:$0xff] %v190
  // Predicated region
  $region14: #{trt_module_forward.1} parent=0 // pred_check
    _
  $region15: #{trt_module_forward.1} parent=0 // pred_check_branch
    %196 = sbr.rel (0) target = $region17
  $region16: #{trt_module_forward.1} parent=0 // pred_region
    _
  $region17: #{trt_module_forward.1} parent=0 // pred_fallthru
    _
  // Predicated region
  $region18: #{trt_module_forward.1} parent=0 // pred_check
    _
  $region19: #{trt_module_forward.1} parent=0 // pred_check_branch
    %198 = sbr.rel (0) target = $region21
  $region20: #{trt_module_forward.1} parent=0 // pred_region
    _
  $region21: #{trt_module_forward.1} parent=0 // pred_fallthru
    _

</llo_original>
